<compile_context>
chip_gen: v5e
topology: v5e:2x2
jax: 0.10.0
libtpu: 0.0.40
codegen_flags: <defaults>
</compile_context>

<pallas_src>
import jax
import jax.numpy as jnp
from jax.experimental import pallas as pl
from jax.experimental.pallas import tpu as pltpu


def _round_up(x: int, m: int) -> int:
    return ((x + m - 1) // m) * m


def _multicrop_kernel(x_ref, w1_ref, b1_ref, w2_ref, b2_ref, out_ref, h_acc):
    """Fused backbone-linear + head-linear over a (rows, K, F) grid.

    x_ref  : [TM, TF]   bf16  row tile of flattened crops (F slice)
    w1_ref : [TF, Dp]   bf16  backbone weight slice
    b1_ref : [1,  Dp]   f32   backbone bias
    w2_ref : [Dp, TN]   bf16  head weight K-tile
    b2_ref : [1,  TN]   f32   head bias K-tile
    out_ref: [TM, TN]   f32   logits tile
    h_acc  : [TM, Dp]   f32   VMEM scratch, cls embedding accumulator
    """
    j = pl.program_id(1)            # K tile index
    f = pl.program_id(2)            # F reduction index
    nf = pl.num_programs(2)

    # --- backbone matmul: accumulate over F only for the first K tile; the
    # accumulated embedding persists in VMEM scratch and is reused for every
    # subsequent K tile of the same row tile.
    @pl.when(jnp.logical_and(j == 0, f == 0))
    def _init():
        h_acc[...] = jnp.zeros_like(h_acc)

    @pl.when(j == 0)
    def _backbone():
        h_acc[...] += jnp.dot(
            x_ref[...], w1_ref[...], preferred_element_type=jnp.float32
        )

    # --- head matmul + biases once the F reduction is complete (finalize).
    @pl.when(f == nf - 1)
    def _head():
        h = (h_acc[...] + b1_ref[...]).astype(jnp.bfloat16)
        logits = jnp.dot(h, w2_ref[...], preferred_element_type=jnp.float32)
        out_ref[...] = (logits + b2_ref[...]).astype(out_ref.dtype)


def multicrop_forward(crops, w1, b1, w2, b2):
    """JAX/Pallas equivalent of MultiCropWrapper.forward.

    crops : list of [B_i, C, H, W] arrays (single resolution, matching the
            reference forward which torch.cat's everything along dim 0).
    Returns a tuple of len(crops) logits arrays, split by per-crop batch size.
    """
    crop_sizes = [int(c.shape[0]) for c in crops]
    concatenated = jnp.concatenate(crops, axis=0)          # [N, C, H, W]
    n_total = concatenated.shape[0]
    x_flat = concatenated.reshape(n_total, -1)             # [N, F] NCHW flatten

    F = x_flat.shape[1]
    D = w1.shape[1]
    K = w2.shape[1]

    # Tile sizes: MXU/lane friendly, generation-aware caps (256-row / 512-lane
    # tiles for realistic shapes, minimal padding for the toy test).
    TM = min(256, _round_up(n_total, 8))
    TN = min(512, _round_up(K, 128))
    TF = min(512, _round_up(F, 128))

    N_pad = _round_up(n_total, TM)
    K_pad = _round_up(K, TN)
    F_pad = _round_up(F, TF)
    D_pad = _round_up(D, 128)

    # bf16 matmul operands (MXU rate + half the DMA bytes); biases stay f32.
    x_p = jnp.zeros((N_pad, F_pad), jnp.bfloat16)
    x_p = x_p.at[:n_total, :F].set(x_flat.astype(jnp.bfloat16))
    w1_p = jnp.zeros((F_pad, D_pad), jnp.bfloat16).at[:F, :D].set(
        w1.astype(jnp.bfloat16))
    b1_p = jnp.zeros((1, D_pad), jnp.float32).at[:, :D].set(
        jnp.reshape(b1, (1, -1)).astype(jnp.float32))
    w2_p = jnp.zeros((D_pad, K_pad), jnp.bfloat16).at[:D, :K].set(
        w2.astype(jnp.bfloat16))
    b2_p = jnp.zeros((1, K_pad), jnp.float32).at[:, :K].set(
        jnp.reshape(b2, (1, -1)).astype(jnp.float32))

    grid = (N_pad // TM, K_pad // TN, F_pad // TF)

    # After the first K tile the embedding is reused from scratch; pin the
    # x / w1 block index so Pallas skips redundant DMA for j > 0.
    def x_map(i, j, f):
        return (i, jnp.where(j == 0, f, 0))

    def w1_map(i, j, f):
        return (jnp.where(j == 0, f, 0), 0)

    logits = pl.pallas_call(
        _multicrop_kernel,
        out_shape=jax.ShapeDtypeStruct((N_pad, K_pad), jnp.float32),
        grid_spec=pltpu.PrefetchScalarGridSpec(
            num_scalar_prefetch=0,
            grid=grid,
            in_specs=[
                pl.BlockSpec((TM, TF), x_map),                     # x
                pl.BlockSpec((TF, D_pad), w1_map),                 # w1
                pl.BlockSpec((1, D_pad), lambda i, j, f: (0, 0)),  # b1
                pl.BlockSpec((D_pad, TN), lambda i, j, f: (0, j)), # w2 (streamed)
                pl.BlockSpec((1, TN), lambda i, j, f: (0, j)),     # b2
            ],
            out_specs=pl.BlockSpec((TM, TN), lambda i, j, f: (i, j)),
            scratch_shapes=[pltpu.VMEM((TM, D_pad), jnp.float32)],
        ),
        compiler_params=pltpu.CompilerParams(
            # rows: independent -> megacore sharding on v7x.
            # K and F: carried dependence via h_acc scratch -> sequential.
            dimension_semantics=("parallel", "arbitrary", "arbitrary"),
            vmem_limit_bytes=32 * 1024 * 1024,
        ),
    )(x_p, w1_p, b1_p, w2_p, b2_p)

    logits = logits[:n_total, :K]

    # Chunk back per crop, splitting by the recorded per-crop batch sizes
    # (robust even if crops have unequal batch sizes, unlike a blind n-way split).
    offsets, acc = [], 0
    for s in crop_sizes[:-1]:
        acc += s
        offsets.append(acc)
    chunks = jnp.split(logits, offsets, axis=0) if offsets else [logits]
    return tuple(chunks)


if __name__ == "__main__":
    # Small shapes consistent with the forward pass.
    B, C, H, W = 2, 4, 16, 16        # each crop: [2, 4, 16, 16] (NCHW)
    n_crops = 3
    F = C * H * W                    # 1024 flattened features
    D = 32                           # backbone embedding dim
    K = 16                           # head output dim

    key = jax.random.PRNGKey(0)
    k_crops, k_w1, k_b1, k_w2, k_b2 = jax.random.split(key, 5)

    # Deterministic synthetic parameters.
    w1 = jax.random.normal(k_w1, (F, D), jnp.float32) * 0.02
    b1 = jax.random.normal(k_b1, (1, D), jnp.float32) * 0.01
    w2 = jax.random.normal(k_w2, (D, K), jnp.float32) * 0.02
    b2 = jax.random.normal(k_b2, (1, K), jnp.float32) * 0.01

    # Deterministic list of crops (single resolution, as in the given spec).
    crop_keys = jax.random.split(k_crops, n_crops)
    crops = [jax.random.normal(k, (B, C, H, W), jnp.float32) for k in crop_keys]

    chunks = multicrop_forward(crops, w1, b1, w2, b2)
    chunks = jax.block_until_ready(chunks)

    # Reference with matching operand precision (bf16 matmul operands, f32 accum).
    x_ref = jnp.concatenate(crops, axis=0).reshape(n_crops * B, -1)
    xb = x_ref.astype(jnp.bfloat16).astype(jnp.float32)
    w1b = w1.astype(jnp.bfloat16).astype(jnp.float32)
    w2b = w2.astype(jnp.bfloat16).astype(jnp.float32)
    h_ref = xb @ w1b + b1
    hb = h_ref.astype(jnp.bfloat16).astype(jnp.float32)
    ref = hb @ w2b + b2
    ref_chunks = jnp.split(ref, n_crops, axis=0)

    assert len(chunks) == n_crops
    for got, want in zip(chunks, ref_chunks):
        assert got.shape == (B, K), got.shape
        err = float(jnp.max(jnp.abs(got - want)))
        assert jnp.allclose(got, want, atol=1e-3, rtol=1e-3), err

    print("KERNEL_OK")
</pallas_src>

<mosaic_0001>
module attributes {stable_mosaic.version = 11 : i64} {
  func.func @_multicrop_kernel(%arg0: i32, %arg1: i32, %arg2: i32, %arg3: memref<8x512xbf16, #tpu.memory_space<vmem>>, %arg4: memref<512x128xbf16, #tpu.memory_space<vmem>>, %arg5: memref<1x128xf32, #tpu.memory_space<vmem>>, %arg6: memref<128x128xbf16, #tpu.memory_space<vmem>>, %arg7: memref<1x128xf32, #tpu.memory_space<vmem>>, %arg8: memref<8x128xf32, #tpu.memory_space<vmem>>, %arg9: memref<8x128xf32, #tpu.memory_space<vmem>>) attributes {dimension_semantics = [#tpu.dimension_semantics<parallel>, #tpu.dimension_semantics<arbitrary>, #tpu.dimension_semantics<arbitrary>], iteration_bounds = array<i64: 1, 1, 2>, scalar_prefetch = 0 : i64, scratch_operands = 1 : i64, tpu.core_type = #tpu.core_type<tc>, window_params = [{transform_indices = @transform_0, window_bounds = array<i64: 8, 512>}, {transform_indices = @transform_1, window_bounds = array<i64: 512, 128>}, {pipeline_mode = #tpu.pipeline_mode<synchronous>, transform_indices = @transform_2, window_bounds = array<i64: 1, 128>}, {transform_indices = @transform_3, window_bounds = array<i64: 128, 128>}, {transform_indices = @transform_4, window_bounds = array<i64: 1, 128>}, {transform_indices = @transform_5, window_bounds = array<i64: 8, 128>}]} {
    %c0_i32 = arith.constant 0 : i32
    %0 = arith.cmpi eq, %arg1, %c0_i32 : i32
    %c0_i32_0 = arith.constant 0 : i32
    %1 = arith.cmpi eq, %arg2, %c0_i32_0 : i32
    %2 = arith.andi %0, %1 : i1
    %3 = arith.extui %2 : i1 to i32
    %c0_i32_1 = arith.constant 0 : i32
    %4 = arith.cmpi ne, %3, %c0_i32_1 : i32
    scf.if %4 {
      %cst = arith.constant 0.000000e+00 : f32
      %11 = vector.broadcast %cst : f32 to vector<8x128xf32>
      %c0 = arith.constant 0 : index
      %c0_5 = arith.constant 0 : index
      %12 = vector.load %arg9[%c0, %c0_5] : memref<8x128xf32, #tpu.memory_space<vmem>>, vector<8x128xf32>
      tpu.vector_store %arg9[%c0, %c0_5], %11 {strides = array<i32>} : memref<8x128xf32, #tpu.memory_space<vmem>>, vector<8x128xf32>,
    } else {
    }
    %c0_i32_2 = arith.constant 0 : i32
    %5 = arith.cmpi eq, %arg1, %c0_i32_2 : i32
    %6 = arith.extui %5 : i1 to i32
    %c0_i32_3 = arith.constant 0 : i32
    %7 = arith.cmpi ne, %6, %c0_i32_3 : i32
    scf.if %7 {
      %c0 = arith.constant 0 : index
      %c0_5 = arith.constant 0 : index
      %11 = vector.load %arg9[%c0, %c0_5] : memref<8x128xf32, #tpu.memory_space<vmem>>, vector<8x128xf32>
      %c0_6 = arith.constant 0 : index
      %c0_7 = arith.constant 0 : index
      %12 = vector.load %arg3[%c0_6, %c0_7] : memref<8x512xbf16, #tpu.memory_space<vmem>>, vector<8x512xbf16>
      %c0_8 = arith.constant 0 : index
      %c0_9 = arith.constant 0 : index
      %13 = vector.load %arg4[%c0_8, %c0_9] : memref<512x128xbf16, #tpu.memory_space<vmem>>, vector<512x128xbf16>
      %cst = arith.constant dense<0.000000e+00> : vector<8x128xf32>
      %14 = tpu.matmul %12, %13, %cst {dimension_numbers = #tpu.dot_dimension_numbers<[1], [0], [0], [1], [0, 0, 1, 1], [], []>} : vector<8x512xbf16>, vector<512x128xbf16>, vector<8x128xf32> -> vector<8x128xf32>
      %15 = arith.addf %11, %14 : vector<8x128xf32>
      %c0_10 = arith.constant 0 : index
      %c0_11 = arith.constant 0 : index
      %16 = vector.load %arg9[%c0_10, %c0_11] : memref<8x128xf32, #tpu.memory_space<vmem>>, vector<8x128xf32>
      tpu.vector_store %arg9[%c0_10, %c0_11], %15 {strides = array<i32>} : memref<8x128xf32, #tpu.memory_space<vmem>>, vector<8x128xf32>,
    } else {
    }
    %c1_i32 = arith.constant 1 : i32
    %8 = arith.cmpi eq, %arg2, %c1_i32 : i32
    %9 = arith.extui %8 : i1 to i32
    %c0_i32_4 = arith.constant 0 : i32
    %10 = arith.cmpi ne, %9, %c0_i32_4 : i32
    scf.if %10 {
      %c0 = arith.constant 0 : index
      %c0_5 = arith.constant 0 : index
      %11 = vector.load %arg9[%c0, %c0_5] : memref<8x128xf32, #tpu.memory_space<vmem>>, vector<8x128xf32>
      %c0_6 = arith.constant 0 : index
      %c0_7 = arith.constant 0 : index
      %12 = vector.load %arg5[%c0_6, %c0_7] : memref<1x128xf32, #tpu.memory_space<vmem>>, vector<1x128xf32>
      %13 = vector.broadcast %12 : vector<1x128xf32> to vector<8x128xf32>
      %14 = arith.addf %11, %13 : vector<8x128xf32>
      %15 = arith.truncf %14 : vector<8x128xf32> to vector<8x128xbf16>
      %c0_8 = arith.constant 0 : index
      %c0_9 = arith.constant 0 : index
      %16 = vector.load %arg6[%c0_8, %c0_9] : memref<128x128xbf16, #tpu.memory_space<vmem>>, vector<128x128xbf16>
      %cst = arith.constant dense<0.000000e+00> : vector<8x128xf32>
      %17 = tpu.matmul %15, %16, %cst {dimension_numbers = #tpu.dot_dimension_numbers<[1], [0], [0], [1], [0, 0, 1, 1], [], []>} : vector<8x128xbf16>, vector<128x128xbf16>, vector<8x128xf32> -> vector<8x128xf32>
      %c0_10 = arith.constant 0 : index
      %c0_11 = arith.constant 0 : index
      %18 = vector.load %arg7[%c0_10, %c0_11] : memref<1x128xf32, #tpu.memory_space<vmem>>, vector<1x128xf32>
      %19 = vector.broadcast %18 : vector<1x128xf32> to vector<8x128xf32>
      %20 = arith.addf %17, %19 : vector<8x128xf32>
      %c0_12 = arith.constant 0 : index
      %c0_13 = arith.constant 0 : index
      %21 = vector.load %arg8[%c0_12, %c0_13] : memref<8x128xf32, #tpu.memory_space<vmem>>, vector<8x128xf32>
      tpu.vector_store %arg8[%c0_12, %c0_13], %20 {strides = array<i32>} : memref<8x128xf32, #tpu.memory_space<vmem>>, vector<8x128xf32>,
    } else {
    }
    return
  }
  func.func @transform_0(%arg0: i32, %arg1: i32, %arg2: i32) -> (i32, i32) {
    %c0_i32 = arith.constant 0 : i32
    %0 = arith.cmpi eq, %arg1, %c0_i32 : i32
    %c0_i32_0 = arith.constant 0 : i32
    %1 = arith.select %0, %arg2, %c0_i32_0 : i32
    %c0_i32_1 = arith.constant 0 : i32
    return %arg0, %1 : i32, i32
  }
  func.func @transform_1(%arg0: i32, %arg1: i32, %arg2: i32) -> (i32, i32) {
    %c0_i32 = arith.constant 0 : i32
    %0 = arith.cmpi eq, %arg1, %c0_i32 : i32
    %c0_i32_0 = arith.constant 0 : i32
    %1 = arith.select %0, %arg2, %c0_i32_0 : i32
    %c0_i32_1 = arith.constant 0 : i32
    %c0_i32_2 = arith.constant 0 : i32
    return %1, %c0_i32_1 : i32, i32
  }
  func.func @transform_2(%arg0: i32, %arg1: i32, %arg2: i32) -> (i32, i32) {
    %c0_i32 = arith.constant 0 : i32
    %c0_i32_0 = arith.constant 0 : i32
    %c0_i32_1 = arith.constant 0 : i32
    return %c0_i32, %c0_i32_0 : i32, i32
  }
  func.func @transform_3(%arg0: i32, %arg1: i32, %arg2: i32) -> (i32, i32) {
    %c0_i32 = arith.constant 0 : i32
    %c0_i32_0 = arith.constant 0 : i32
    return %c0_i32, %arg1 : i32, i32
  }
  func.func @transform_4(%arg0: i32, %arg1: i32, %arg2: i32) -> (i32, i32) {
    %c0_i32 = arith.constant 0 : i32
    %c0_i32_0 = arith.constant 0 : i32
    return %c0_i32, %arg1 : i32, i32
  }
  func.func @transform_5(%arg0: i32, %arg1: i32, %arg2: i32) -> (i32, i32) {
    %c0_i32 = arith.constant 0 : i32
    return %arg0, %arg1 : i32, i32
  }
}

</mosaic_0001>

<llo_original>
// kernel: tpu_custom_call.1
$region0: #{tpu_custom_call.1}
  #allocation0 [shape = 'u32[]', space=smem, size = 0x4, offset = 0x4, fixed_abs, tag = 'smem constant byte address 0x4 - core index']
  #allocation1 [shape = 'u32[72,128]{1,0:T(1,128)}', space=vmem, size = 0x9000, scoped, tag = 'internal scratch']
  #allocation2 [shape = 'f32[8,128]{1,0:T(8,128)}', space=vmem, size = 0x1000, scoped, tag = 'scratch operand']
  %s0 = inlined_call_operand.hbm [shape: bf16[8,1024], index: 0, kind: input, shape index: {}]
  %s1 = inlined_call_operand.hbm [shape: bf16[1024,128], index: 1, kind: input, shape index: {}]
  %s2 = inlined_call_operand.vmem [shape: f32[1,128], index: 2, kind: input, shape index: {}]
  %s3 = inlined_call_operand.hbm [shape: bf16[128,128], index: 3, kind: input, shape index: {}]
  %s4 = inlined_call_operand.vmem [shape: f32[1,128], index: 4, kind: input, shape index: {}]
  %s5 = inlined_call_operand.hbm [shape: f32[8,128], index: 5, kind: output, shape index: {}]
  %s6 = sld [smem:[#allocation0]]
  $region77: #{tpu_custom_call.1} parent=0
    _
  %s8 = ssub.s32 1, %s6
  %s9 = scalar_select 0, %s8, %s6
  $region1: #{tpu_custom_call.1} parent=0
    #allocation3 [shape = 'u8[16384]{0}', space=vmem, size = 0x4000, scoped, tag = 'input window, operand 0']
    #allocation4 [shape = 's32[2]{0}', space=sflag, size = 0x8, scoped, tag = 'scoped memory for tpu_custom_call.1']
    #allocation5 [shape = 's32[2]{0}', space=sflag, size = 0x8, scoped, tag = 'scoped memory for tpu_custom_call.1']
    #allocation6 [shape = 'u8[262144]{0}', space=vmem, size = 0x40000, scoped, tag = 'input window, operand 1']
    #allocation7 [shape = 's32[2]{0}', space=sflag, size = 0x8, scoped, tag = 'scoped memory for tpu_custom_call.1']
    #allocation8 [shape = 'u8[32768]{0}', space=vmem, size = 0x8000, scoped, tag = 'input window, operand 3, single buffered']
    #allocation9 [shape = 'u8[4096]{0}', space=vmem, size = 0x1000, scoped, tag = 'output window, operand 0, single buffered']
    %10 = vsyncpa [#allocation4], 0
    %s11 = scalar_lea.sflag [#allocation4], 1
    %12 = vsyncpa %s11, 0
    %13 = vsyncpa [#allocation7], 0
    %s14 = scalar_lea.sflag [#allocation7], 1
    %15 = vsyncpa %s14, 0
    %16 = vsyncpa [#allocation5], 0
    loop: start=0, step=1, limit=4
    $region2: #{tpu_custom_call.1} parent=1 // loop_pre_header
      _
    $region3: #{tpu_custom_call.1} parent=1 // loop_header
      %s18 = sphi 0, %s22
      %p19 = scmp.ge.s32.totalorder %s18, 4
      %s25 = sphi 0, %s44
      %s26 = sphi 0, %s40
      %s27 = sphi 0, %s36
      %s28 = sphi 0, %s25
      %s29 = sphi 0, %s26
      %s30 = sphi 0, %s27
      %s31 = sphi 0, %s28
      %s32 = sphi 0, %s29
      %s33 = sphi 0, %s30
      %s53 = sphi 0, %s55
      %s56 = sphi 0, %s53
      %s57 = sphi 0, %s56
      %s73 = sphi 0, %s57
      %s83 = sphi 0, %s85
      %s86 = sphi 0, %s83
      %s87 = sphi 0, %s86
      %s103 = sphi 0, %s87
      %s107 = sphi 0, %s107
      %s109 = sphi 0, %s107
      %s110 = sphi 0, %s109
      %s124 = sphi 0, %s110
      %s130 = sphi 0, %s132
      %s133 = sphi 0, %s130
      %s134 = sphi 0, %s133
      %s150 = sphi 0, %s134
      %s156 = sphi 0, %s158
      %s159 = sphi 0, %s156
      %s160 = sphi 0, %s159
      %s176 = sphi 0, %s160
      %s184 = sphi 0, %s186
      %s187 = sphi 0, %s184
      %s188 = sphi 0, %s187
      %s204 = sphi 0, %s188
    $region4: #{tpu_custom_call.1} parent=1 // loop_header_branch
      %21 = sbr.rel (%p19) target = $region8
    $region5: #{tpu_custom_call.1} parent=1 // loop_body
      %s23 = ssub.s32 %s18, 1
      %s24 = ssub.s32 %s18, 2
      %s34 = sadd.s32 1, %s27
      %p35 = scmp.ge.s32.totalorder %s34, 2
      %s36 = scalar_select %p35, 0, %s34
      %s37 = sadd.s32 1, %s26
      %s38 = scalar_select %p35, %s37, %s26
      %p39 = scmp.ge.s32.totalorder %s38, 1
      %s40 = scalar_select %p39, 0, %s38
      %s41 = sadd.s32 1, %s25
      %s42 = scalar_select %p39, %s41, %s25
      %p43 = scmp.ge.s32.totalorder %s42, 1
      %s44 = scalar_select %p43, 0, %s42
      %p45 = scmp.eq.s32.totalorder %s26, 0
      %s46 = scalar_select %p45, %s27, 0
      %p47 = scmp.eq.s32.totalorder %s40, 0
      %s48 = scalar_select %p47, %s36, 0
      %s49 = ssub.s32 %s25, %s44
      %s50 = ssub.s32 %s46, %s48
      %s51 = sor.u32 %s49, %s50
      %p52 = scmp.eq.s32.totalorder %s51, 0
      %s54 = sadd.s32 %s53, 1
      %s55 = scalar_select %p52, %s53, %s54
      %p58 = pneg %p52
      %p59 = scmp.eq.s32.totalorder %s18, 1
      %p60 = por %p58, %p59
      %p61 = scmp.ne.s32.totalorder %s53, %s56
      %p62 = scmp.eq.s32.totalorder %s18, 0
      %p63 = por %p61, %p62
      %p64 = scmp.ne.s32.totalorder %s53, %s56
      %p65 = scmp.eq.s32.totalorder %s23, 1
      %p66 = por %p64, %p65
      %p67 = scmp.ne.s32.totalorder %s56, %s57
      %p68 = scmp.eq.s32.totalorder %s23, 0
      %p69 = por %p67, %p68
      %p70 = scmp.ne.s32.totalorder %s56, %s57
      %p71 = scmp.eq.s32.totalorder %s24, 1
      %p72 = por %p70, %p71
      %p74 = scmp.ne.s32.totalorder %s57, %s73
      %p75 = scmp.eq.s32.totalorder %s24, 0
      %p76 = por %p74, %p75
      %p77 = scmp.eq.s32.totalorder %s26, 0
      %s78 = scalar_select %p77, %s27, 0
      %p79 = scmp.eq.s32.totalorder %s40, 0
      %s80 = scalar_select %p79, %s36, 0
      %s81 = ssub.s32 %s78, %s80
      %p82 = scmp.eq.s32.totalorder %s81, 0
      %s84 = sadd.s32 %s83, 1
      %s85 = scalar_select %p82, %s83, %s84
      %p88 = pneg %p82
      %p89 = scmp.eq.s32.totalorder %s18, 1
      %p90 = por %p88, %p89
      %p91 = scmp.ne.s32.totalorder %s83, %s86
      %p92 = scmp.eq.s32.totalorder %s18, 0
      %p93 = por %p91, %p92
      %p94 = scmp.ne.s32.totalorder %s83, %s86
      %p95 = scmp.eq.s32.totalorder %s23, 1
      %p96 = por %p94, %p95
      %p97 = scmp.ne.s32.totalorder %s86, %s87
      %p98 = scmp.eq.s32.totalorder %s23, 0
      %p99 = por %p97, %p98
      %p100 = scmp.ne.s32.totalorder %s86, %s87
      %p101 = scmp.eq.s32.totalorder %s24, 1
      %p102 = por %p100, %p101
      %p104 = scmp.ne.s32.totalorder %s87, %s103
      %p105 = scmp.eq.s32.totalorder %s24, 0
      %p106 = por %p104, %p105
      %s108 = sadd.s32 %s107, 1
      %p111 = scmp.eq.s32.totalorder %s18, 1
      %p112 = scmp.ne.s32.totalorder %s107, %s109
      %p113 = scmp.eq.s32.totalorder %s18, 0
      %p114 = por %p112, %p113
      %p115 = scmp.ne.s32.totalorder %s107, %s109
      %p116 = scmp.eq.s32.totalorder %s23, 1
      %p117 = por %p115, %p116
      %p118 = scmp.ne.s32.totalorder %s109, %s110
      %p119 = scmp.eq.s32.totalorder %s23, 0
      %p120 = por %p118, %p119
      %p121 = scmp.ne.s32.totalorder %s109, %s110
      %p122 = scmp.eq.s32.totalorder %s24, 1
      %p123 = por %p121, %p122
      %p125 = scmp.ne.s32.totalorder %s110, %s124
      %p126 = scmp.eq.s32.totalorder %s24, 0
      %p127 = por %p125, %p126
      %s128 = ssub.s32 %s26, %s40
      %p129 = scmp.eq.s32.totalorder %s128, 0
      %s131 = sadd.s32 %s130, 1
      %s132 = scalar_select %p129, %s130, %s131
      %p135 = pneg %p129
      %p136 = scmp.eq.s32.totalorder %s18, 1
      %p137 = por %p135, %p136
      %p138 = scmp.ne.s32.totalorder %s130, %s133
      %p139 = scmp.eq.s32.totalorder %s18, 0
      %p140 = por %p138, %p139
      %p141 = scmp.ne.s32.totalorder %s130, %s133
      %p142 = scmp.eq.s32.totalorder %s23, 1
      %p143 = por %p141, %p142
      %p144 = scmp.ne.s32.totalorder %s133, %s134
      %p145 = scmp.eq.s32.totalorder %s23, 0
      %p146 = por %p144, %p145
      %p147 = scmp.ne.s32.totalorder %s133, %s134
      %p148 = scmp.eq.s32.totalorder %s24, 1
      %p149 = por %p147, %p148
      %p151 = scmp.ne.s32.totalorder %s134, %s150
      %p152 = scmp.eq.s32.totalorder %s24, 0
      %p153 = por %p151, %p152
      %s154 = ssub.s32 %s26, %s40
      %p155 = scmp.eq.s32.totalorder %s154, 0
      %s157 = sadd.s32 %s156, 1
      %s158 = scalar_select %p155, %s156, %s157
      %p161 = pneg %p155
      %p162 = scmp.eq.s32.totalorder %s18, 1
      %p163 = por %p161, %p162
      %p164 = scmp.ne.s32.totalorder %s156, %s159
      %p165 = scmp.eq.s32.totalorder %s18, 0
      %p166 = por %p164, %p165
      %p167 = scmp.ne.s32.totalorder %s156, %s159
      %p168 = scmp.eq.s32.totalorder %s23, 1
      %p169 = por %p167, %p168
      %p170 = scmp.ne.s32.totalorder %s159, %s160
      %p171 = scmp.eq.s32.totalorder %s23, 0
      %p172 = por %p170, %p171
      %p173 = scmp.ne.s32.totalorder %s159, %s160
      %p174 = scmp.eq.s32.totalorder %s24, 1
      %p175 = por %p173, %p174
      %p177 = scmp.ne.s32.totalorder %s160, %s176
      %p178 = scmp.eq.s32.totalorder %s24, 0
      %p179 = por %p177, %p178
      %s180 = ssub.s32 %s25, %s44
      %s181 = ssub.s32 %s26, %s40
      %s182 = sor.u32 %s180, %s181
      %p183 = scmp.eq.s32.totalorder %s182, 0
      %s185 = sadd.s32 %s184, 1
      %s186 = scalar_select %p183, %s184, %s185
      %p189 = pneg %p183
      %p190 = scmp.eq.s32.totalorder %s18, 1
      %p191 = por %p189, %p190
      %p192 = scmp.ne.s32.totalorder %s184, %s187
      %p193 = scmp.eq.s32.totalorder %s18, 0
      %p194 = por %p192, %p193
      %p195 = scmp.ne.s32.totalorder %s184, %s187
      %p196 = scmp.eq.s32.totalorder %s23, 1
      %p197 = por %p195, %p196
      %p198 = scmp.ne.s32.totalorder %s187, %s188
      %p199 = scmp.eq.s32.totalorder %s23, 0
      %p200 = por %p198, %p199
      %p201 = scmp.ne.s32.totalorder %s187, %s188
      %p202 = scmp.eq.s32.totalorder %s24, 1
      %p203 = por %p201, %p202
      %p205 = scmp.ne.s32.totalorder %s188, %s204
      %p206 = scmp.eq.s32.totalorder %s24, 0
      %p207 = por %p205, %p206
      %p208 = scmp.le.s32.totalorder 1, %s18
      %p209 = scmp.lt.s32.totalorder %s18, 3
      %p210 = pnand %p208, %p209
      %p211 = pneg %p210
      // Predicated region
      $region9: #{tpu_custom_call.1} parent=5 // pred_check
        _
      $region10: #{tpu_custom_call.1} parent=5 // pred_check_branch
        %213 = sbr.rel (%p210) target = $region12
      $region11: #{tpu_custom_call.1} parent=5 // pred_region
        %s214 = ssub.s32 %s18, 1
        // Predicated region
        $region13: #{tpu_custom_call.1} parent=11 // pred_check
          %p215 = pneg %p120
        $region14: #{tpu_custom_call.1} parent=11 // pred_check_branch
          %217 = sbr.rel (%p215) target = $region16
        $region15: #{tpu_custom_call.1} parent=11 // pred_region
          _
        $region16: #{tpu_custom_call.1} parent=11 // pred_fallthru
          _
        // Predicated region
        $region17: #{tpu_custom_call.1} parent=11 // pred_check
          %p218 = pneg %p146
        $region18: #{tpu_custom_call.1} parent=11 // pred_check_branch
          %220 = sbr.rel (%p218) target = $region20
        $region19: #{tpu_custom_call.1} parent=11 // pred_region
          %222 = vsyncadd [#allocation7], 0
          %s223 = smul.addr %s29, 4
          %s224 = scalar_lea.hbm %s3, %s223
          %s225 = sshll.u32 %s224, 4
          %s226 = int_to_ptr.hbm [resolvable:$true] %s225
          %s227 = sshll.u32 [#allocation8], 4
          %s228 = int_to_ptr.vmem [resolvable:$true] %s227
          %233 = dma.hbm_to_vmem [thread:$0]  %s226, 1024, %s228, [#allocation7], 64, 64, 4
        $region20: #{tpu_custom_call.1} parent=11 // pred_fallthru
          _
        // Predicated region
        $region21: #{tpu_custom_call.1} parent=11 // pred_check
          %p234 = pneg %p172
        $region22: #{tpu_custom_call.1} parent=11 // pred_check_branch
          %236 = sbr.rel (%p234) target = $region24
        $region23: #{tpu_custom_call.1} parent=11 // pred_region
          %p237 = scmp.lt.s32.totalorder %s29, 0
          %s238 = scalar_select %p237, %s29, 0
          %s239 = scalar_lea.vmem %s4, %s238
        $region24: #{tpu_custom_call.1} parent=11 // pred_fallthru
          _
      $region12: #{tpu_custom_call.1} parent=5 // pred_fallthru
        _
      %p240 = scmp.lt.s32.totalorder %s18, 2
      // Predicated region
      $region25: #{tpu_custom_call.1} parent=5 // pred_check
        %p241 = pneg %p240
      $region26: #{tpu_custom_call.1} parent=5 // pred_check_branch
        %243 = sbr.rel (%p241) target = $region28
      $region27: #{tpu_custom_call.1} parent=5 // pred_region
        // Predicated region
        $region29: #{tpu_custom_call.1} parent=27 // pred_check
          %p244 = pneg %p63
        $region30: #{tpu_custom_call.1} parent=27 // pred_check_branch
          %246 = sbr.rel (%p244) target = $region32
        $region31: #{tpu_custom_call.1} parent=27 // pred_region
          %s247 = sand.u32 %s53, 1
          %s248 = scalar_lea.sflag [#allocation4], %s247
          %s249 = sand.u32 %s53, 1
          %s250 = smul.addr %s249, 16
          %s251 = scalar_lea.vmem [#allocation3], %s250
          %p252 = scmp.eq.s32.totalorder %s26, 0
          %s253 = scalar_select %p252, %s27, 0
          %s254 = smul.u32 4, %s253
          %256 = vsyncadd %s248, 0
          %s257 = smul.addr %s25, 8
          %s258 = sadd.s32 %s254, %s257
          %s259 = smul.addr %s258, 4
          %s260 = scalar_lea.hbm %s0, %s259
          %s262 = sshll.u32 %s260, 4
          %s263 = int_to_ptr.hbm [resolvable:$true] %s262
          %s264 = sshll.u32 %s251, 4
          %s265 = int_to_ptr.vmem [resolvable:$true] %s264
          %267 = dma.hbm_to_vmem [thread:$0]  %s263, 256, %s265, %s248
        $region32: #{tpu_custom_call.1} parent=27 // pred_fallthru
          _
        // Predicated region
        $region33: #{tpu_custom_call.1} parent=27 // pred_check
          %p268 = pneg %p93
        $region34: #{tpu_custom_call.1} parent=27 // pred_check_branch
          %270 = sbr.rel (%p268) target = $region36
        $region35: #{tpu_custom_call.1} parent=27 // pred_region
          %s271 = sand.u32 %s18, 1
          %s272 = scalar_lea.sflag [#allocation7], %s271
          %s273 = sand.u32 %s83, 1
          %s274 = smul.addr %s273, 256
          %s275 = scalar_lea.vmem [#allocation6], %s274
          %p276 = scmp.eq.s32.totalorder %s26, 0
          %s277 = scalar_select %p276, %s27, 0
          %s278 = smul.u32 64, %s277
          %280 = vsyncadd %s272, 0
          %s281 = smul.addr %s278, 4
          %s282 = scalar_lea.hbm %s1, %s281
          %s283 = sshll.u32 %s282, 4
          %s284 = int_to_ptr.hbm [resolvable:$true] %s283
          %s285 = sshll.u32 %s275, 4
          %s286 = int_to_ptr.vmem [resolvable:$true] %s285
          %291 = dma.hbm_to_vmem [thread:$0]  %s284, 4096, %s286, %s272, 64, 64, 4
        $region36: #{tpu_custom_call.1} parent=27 // pred_fallthru
          _
      $region28: #{tpu_custom_call.1} parent=5 // pred_fallthru
        _
      %p292 = scmp.le.s32.totalorder 1, %s18
      %p293 = scmp.lt.s32.totalorder %s18, 3
      %p294 = pnand %p292, %p293
      %p295 = pneg %p294
      // Predicated region
      $region37: #{tpu_custom_call.1} parent=5 // pred_check
        _
      $region38: #{tpu_custom_call.1} parent=5 // pred_check_branch
        %297 = sbr.rel (%p294) target = $region40
      $region39: #{tpu_custom_call.1} parent=5 // pred_region
        %s298 = ssub.s32 %s18, 1
        %s299 = sand.u32 %s56, 1
        %s300 = scalar_lea.sflag [#allocation4], %s299
        %s301 = sand.u32 %s56, 1
        %s302 = smul.addr %s301, 16
        %s303 = scalar_lea.vmem [#allocation3], %s302
        // Predicated region
        $region41: #{tpu_custom_call.1} parent=39 // pred_check
          %p304 = pneg %p69
        $region42: #{tpu_custom_call.1} parent=39 // pred_check_branch
          %306 = sbr.rel (%p304) target = $region44
        $region43: #{tpu_custom_call.1} parent=39 // pred_region
          %308 = dma.done %s300, 256
        $region44: #{tpu_custom_call.1} parent=39 // pred_fallthru
          _
        %s309 = sand.u32 %s23, 1
        %s310 = scalar_lea.sflag [#allocation7], %s309
        %s311 = sand.u32 %s86, 1
        %s312 = smul.addr %s311, 256
        %s313 = scalar_lea.vmem [#allocation6], %s312
        // Predicated region
        $region45: #{tpu_custom_call.1} parent=39 // pred_check
          %p314 = pneg %p99
        $region46: #{tpu_custom_call.1} parent=39 // pred_check_branch
          %316 = sbr.rel (%p314) target = $region48
        $region47: #{tpu_custom_call.1} parent=39 // pred_region
          %318 = dma.done %s310, 4096
        $region48: #{tpu_custom_call.1} parent=39 // pred_fallthru
          _
        // Predicated region
        $region49: #{tpu_custom_call.1} parent=39 // pred_check
          %p319 = pneg %p146
        $region50: #{tpu_custom_call.1} parent=39 // pred_check_branch
          %321 = sbr.rel (%p319) target = $region52
        $region51: #{tpu_custom_call.1} parent=39 // pred_region
          %323 = dma.done [#allocation7], 1024
        $region52: #{tpu_custom_call.1} parent=39 // pred_fallthru
          _
        %s324 = sand.u32 %s56, 1
        %s325 = scalar_lea.sflag [#allocation4], %s324
        %s326 = sand.u32 %s56, 1
        %s327 = smul.addr %s326, 16
        %s328 = scalar_lea.vmem [#allocation3], %s327
        %p329 = pneg %p69
        %p330 = pneg %p66
        %s331 = sand.u32 %s23, 1
        %s332 = scalar_lea.sflag [#allocation7], %s331
        %s333 = sand.u32 %s86, 1
        %s334 = smul.addr %s333, 256
        %s335 = scalar_lea.vmem [#allocation6], %s334
        %p336 = pneg %p99
        %p337 = pneg %p96
        %p338 = pneg %p120
        %p339 = pneg %p117
        %p340 = pneg %p146
        %p341 = pneg %p143
        %p342 = scmp.lt.s32.totalorder %s29, 0
        %s343 = scalar_select %p342, %s29, 0
        %s344 = scalar_lea.vmem %s4, %s343
        %p345 = pneg %p172
        %p346 = pneg %p169
        %p347 = pneg %p200
        %p348 = pneg %p197
        %p349 = scmp.eq.s32.totalorder %s29, 0
        %s350 = scalar_select %p349, %s30, 0
        %s351 = smul.u32 4, %s350
        %p352 = scmp.eq.s32.totalorder %s29, 0
        %s353 = scalar_select %p352, %s30, 0
        %s354 = smul.u32 64, %s353
        %p355 = scmp.lt.s32.totalorder %s29, 0
        %s356 = scalar_select %p355, %s29, 0
        %s357 = scalar_lea.vmem %s4, %s356
        %p358 = scmp.eq.s32.totalorder %s29, 0
        %p359 = scmp.eq.s32.totalorder %s30, 0
        %p360 = pnand %p358, %p359
        %p361 = pneg %p360
        // Predicated region
        $region53: #{tpu_custom_call.1} parent=39 // pred_check
          _
        $region54: #{tpu_custom_call.1} parent=39 // pred_check_branch
          %363 = sbr.rel (%p360) target = $region56
        $region55: #{tpu_custom_call.1} parent=39 // pred_region
          %364 = vst [vmem:[#allocation2] sm:$0xff] 0.0
        $region56: #{tpu_custom_call.1} parent=39 // pred_fallthru
          _
        // Predicated region
        $region57: #{tpu_custom_call.1} parent=39 // pred_check
          %p365 = pneg %p358
        $region58: #{tpu_custom_call.1} parent=39 // pred_check_branch
          %367 = sbr.rel (%p365) target = $region60
        $region59: #{tpu_custom_call.1} parent=39 // pred_region
          %v368 = vld [vmem:[#allocation2] sm:$0xff]
          %v369 = vld [vmem:[%s303] sm:$0xff]
          %v370 = vld [vmem:[%s303 + $0x8] sm:$0xff]
          %v371 = vld [vmem:[%s313] sm:$0xf]
          %v372 = vld [vmem:[%s313 + $0x4] sm:$0xf]
          %v373 = vld [vmem:[%s313 + $0x8] sm:$0xf]
          %v374 = vld [vmem:[%s313 + $0xc] sm:$0xf]
          %v375 = vld [vmem:[%s313 + $0x10] sm:$0xf]
          %v376 = vld [vmem:[%s313 + $0x14] sm:$0xf]
          %v377 = vld [vmem:[%s313 + $0x18] sm:$0xf]
          %v378 = vld [vmem:[%s313 + $0x1c] sm:$0xf]
          %v379 = vld [vmem:[%s313 + $0x20] sm:$0xf]
          %v380 = vld [vmem:[%s313 + $0x24] sm:$0xf]
          %v381 = vld [vmem:[%s313 + $0x28] sm:$0xf]
          %v382 = vld [vmem:[%s313 + $0x2c] sm:$0xf]
          %v383 = vld [vmem:[%s313 + $0x30] sm:$0xf]
          %v384 = vld [vmem:[%s313 + $0x34] sm:$0xf]
          %v385 = vld [vmem:[%s313 + $0x38] sm:$0xf]
          %v386 = vld [vmem:[%s313 + $0x3c] sm:$0xf]
          %v387 = vld [vmem:[%s313 + $0x40] sm:$0xf]
          %v388 = vld [vmem:[%s313 + $0x44] sm:$0xf]
          %v389 = vld [vmem:[%s313 + $0x48] sm:$0xf]
          %v390 = vld [vmem:[%s313 + $0x4c] sm:$0xf]
          %v391 = vld [vmem:[%s313 + $0x50] sm:$0xf]
          %v392 = vld [vmem:[%s313 + $0x54] sm:$0xf]
          %v393 = vld [vmem:[%s313 + $0x58] sm:$0xf]
          %v394 = vld [vmem:[%s313 + $0x5c] sm:$0xf]
          %v395 = vld [vmem:[%s313 + $0x60] sm:$0xf]
          %v396 = vld [vmem:[%s313 + $0x64] sm:$0xf]
          %v397 = vld [vmem:[%s313 + $0x68] sm:$0xf]
          %v398 = vld [vmem:[%s313 + $0x6c] sm:$0xf]
          %v399 = vld [vmem:[%s313 + $0x70] sm:$0xf]
          %v400 = vld [vmem:[%s313 + $0x74] sm:$0xf]
          %v401 = vld [vmem:[%s313 + $0x78] sm:$0xf]
          %v402 = vld [vmem:[%s313 + $0x7c] sm:$0xf]
          %v403 = vld [vmem:[%s313 + $0x80] sm:$0xf]
          %v404 = vld [vmem:[%s313 + $0x84] sm:$0xf]
          %v405 = vld [vmem:[%s313 + $0x88] sm:$0xf]
          %v406 = vld [vmem:[%s313 + $0x8c] sm:$0xf]
          %v407 = vld [vmem:[%s313 + $0x90] sm:$0xf]
          %v408 = vld [vmem:[%s313 + $0x94] sm:$0xf]
          %v409 = vld [vmem:[%s313 + $0x98] sm:$0xf]
          %v410 = vld [vmem:[%s313 + $0x9c] sm:$0xf]
          %v411 = vld [vmem:[%s313 + $0xa0] sm:$0xf]
          %v412 = vld [vmem:[%s313 + $0xa4] sm:$0xf]
          %v413 = vld [vmem:[%s313 + $0xa8] sm:$0xf]
          %v414 = vld [vmem:[%s313 + $0xac] sm:$0xf]
          %v415 = vld [vmem:[%s313 + $0xb0] sm:$0xf]
          %v416 = vld [vmem:[%s313 + $0xb4] sm:$0xf]
          %v417 = vld [vmem:[%s313 + $0xb8] sm:$0xf]
          %v418 = vld [vmem:[%s313 + $0xbc] sm:$0xf]
          %v419 = vld [vmem:[%s313 + $0xc0] sm:$0xf]
          %v420 = vld [vmem:[%s313 + $0xc4] sm:$0xf]
          %v421 = vld [vmem:[%s313 + $0xc8] sm:$0xf]
          %v422 = vld [vmem:[%s313 + $0xcc] sm:$0xf]
          %v423 = vld [vmem:[%s313 + $0xd0] sm:$0xf]
          %v424 = vld [vmem:[%s313 + $0xd4] sm:$0xf]
          %v425 = vld [vmem:[%s313 + $0xd8] sm:$0xf]
          %v426 = vld [vmem:[%s313 + $0xdc] sm:$0xf]
          %v427 = vld [vmem:[%s313 + $0xe0] sm:$0xf]
          %v428 = vld [vmem:[%s313 + $0xe4] sm:$0xf]
          %v429 = vld [vmem:[%s313 + $0xe8] sm:$0xf]
          %v430 = vld [vmem:[%s313 + $0xec] sm:$0xf]
          %v431 = vld [vmem:[%s313 + $0xf0] sm:$0xf]
          %v432 = vld [vmem:[%s313 + $0xf4] sm:$0xf]
          %v433 = vld [vmem:[%s313 + $0xf8] sm:$0xf]
          %v434 = vld [vmem:[%s313 + $0xfc] sm:$0xf]
          %v437 = vunpack.c.l.b16 %v369
          %v438 = vunpack.c.h.b16 %v369
          %v439 = vunpack.c.l.b16 %v370
          %v440 = vunpack.c.h.b16 %v370
          %v441 = vpack.c.b16 %v437, %v437
          %v442 = vpack.c.b16 %v438, %v438
          %v443 = vpack.c.b16 %v439, %v439
          %v444 = vpack.c.b16 %v440, %v440
          %v513 = vunpack.c.l.b16 %v371
          %v514 = vunpack.c.l.b16 %v372
          %v515 = vunpack.c.l.b16 %v373
          %v516 = vunpack.c.l.b16 %v374
          %v517 = vunpack.c.l.b16 %v375
          %v518 = vunpack.c.l.b16 %v376
          %v519 = vunpack.c.l.b16 %v377
          %v520 = vunpack.c.l.b16 %v378
          %v521 = vunpack.c.l.b16 %v379
          %v522 = vunpack.c.l.b16 %v380
          %v523 = vunpack.c.l.b16 %v381
          %v524 = vunpack.c.l.b16 %v382
          %v525 = vunpack.c.l.b16 %v383
          %v526 = vunpack.c.l.b16 %v384
          %v527 = vunpack.c.l.b16 %v385
          %v528 = vunpack.c.l.b16 %v386
          %v529 = vunpack.c.l.b16 %v387
          %v530 = vunpack.c.l.b16 %v388
          %v531 = vunpack.c.l.b16 %v389
          %v532 = vunpack.c.l.b16 %v390
          %v533 = vunpack.c.l.b16 %v391
          %v534 = vunpack.c.l.b16 %v392
          %v535 = vunpack.c.l.b16 %v393
          %v536 = vunpack.c.l.b16 %v394
          %v537 = vunpack.c.l.b16 %v395
          %v538 = vunpack.c.l.b16 %v396
          %v539 = vunpack.c.l.b16 %v397
          %v540 = vunpack.c.l.b16 %v398
          %v541 = vunpack.c.l.b16 %v399
          %v542 = vunpack.c.l.b16 %v400
          %v543 = vunpack.c.l.b16 %v401
          %v544 = vunpack.c.l.b16 %v402
          %v545 = vunpack.c.l.b16 %v403
          %v546 = vunpack.c.l.b16 %v404
          %v547 = vunpack.c.l.b16 %v405
          %v548 = vunpack.c.l.b16 %v406
          %v549 = vunpack.c.l.b16 %v407
          %v550 = vunpack.c.l.b16 %v408
          %v551 = vunpack.c.l.b16 %v409
          %v552 = vunpack.c.l.b16 %v410
          %v553 = vunpack.c.l.b16 %v411
          %v554 = vunpack.c.l.b16 %v412
          %v555 = vunpack.c.l.b16 %v413
          %v556 = vunpack.c.l.b16 %v414
          %v557 = vunpack.c.l.b16 %v415
          %v558 = vunpack.c.l.b16 %v416
          %v559 = vunpack.c.l.b16 %v417
          %v560 = vunpack.c.l.b16 %v418
          %v561 = vunpack.c.l.b16 %v419
          %v562 = vunpack.c.l.b16 %v420
          %v563 = vunpack.c.l.b16 %v421
          %v564 = vunpack.c.l.b16 %v422
          %v565 = vunpack.c.l.b16 %v423
          %v566 = vunpack.c.l.b16 %v424
          %v567 = vunpack.c.l.b16 %v425
          %v568 = vunpack.c.l.b16 %v426
          %v569 = vunpack.c.l.b16 %v427
          %v570 = vunpack.c.l.b16 %v428
          %v571 = vunpack.c.l.b16 %v429
          %v572 = vunpack.c.l.b16 %v430
          %v573 = vunpack.c.l.b16 %v431
          %v574 = vunpack.c.l.b16 %v432
          %v575 = vunpack.c.l.b16 %v433
          %v576 = vunpack.c.l.b16 %v434
          %v577 = vpack.c.b16 %v514, %v513
          %v578 = vpack.c.b16 %v516, %v515
          %v579 = vpack.c.b16 %v518, %v517
          %v580 = vpack.c.b16 %v520, %v519
          %v581 = vpack.c.b16 %v522, %v521
          %v582 = vpack.c.b16 %v524, %v523
          %v583 = vpack.c.b16 %v526, %v525
          %v584 = vpack.c.b16 %v528, %v527
          %v585 = vpack.c.b16 %v530, %v529
          %v586 = vpack.c.b16 %v532, %v531
          %v587 = vpack.c.b16 %v534, %v533
          %v588 = vpack.c.b16 %v536, %v535
          %v589 = vpack.c.b16 %v538, %v537
          %v590 = vpack.c.b16 %v540, %v539
          %v591 = vpack.c.b16 %v542, %v541
          %v592 = vpack.c.b16 %v544, %v543
          %v593 = vpack.c.b16 %v546, %v545
          %v594 = vpack.c.b16 %v548, %v547
          %v595 = vpack.c.b16 %v550, %v549
          %v596 = vpack.c.b16 %v552, %v551
          %v597 = vpack.c.b16 %v554, %v553
          %v598 = vpack.c.b16 %v556, %v555
          %v599 = vpack.c.b16 %v558, %v557
          %v600 = vpack.c.b16 %v560, %v559
          %v601 = vpack.c.b16 %v562, %v561
          %v602 = vpack.c.b16 %v564, %v563
          %v603 = vpack.c.b16 %v566, %v565
          %v604 = vpack.c.b16 %v568, %v567
          %v605 = vpack.c.b16 %v570, %v569
          %v606 = vpack.c.b16 %v572, %v571
          %v607 = vpack.c.b16 %v574, %v573
          %v608 = vpack.c.b16 %v576, %v575
          %641 = vmatpush.bf16.msra.mxu0 %v584
          %642 = vmatpush.bf16.msra.mxu0 %v583
          %643 = vmatpush.bf16.msra.mxu0 %v582
          %644 = vmatpush.bf16.msra.mxu0 %v581
          %645 = vmatpush.bf16.msra.mxu0 %v580
          %646 = vmatpush.bf16.msra.mxu0 %v579
          %647 = vmatpush.bf16.msra.mxu0 %v578
          %648 = vmatpush.bf16.msra.mxu0 %v577
          %649 = vmatmul.bf16.gmra.mxu0 %v441
          %v650 = vpop.f32.mrf.mxu0
          %v651 = vadd.f32 0.0, %v650
          %v652 = vpop.f32.mrf.mxu0
          %653 = vdwg.mxu0
          %654 = vmatpush.bf16.msra.mxu0 %v592
          %655 = vmatpush.bf16.msra.mxu0 %v591
          %656 = vmatpush.bf16.msra.mxu0 %v590
          %657 = vmatpush.bf16.msra.mxu0 %v589
          %658 = vmatpush.bf16.msra.mxu0 %v588
          %659 = vmatpush.bf16.msra.mxu0 %v587
          %660 = vmatpush.bf16.msra.mxu0 %v586
          %661 = vmatpush.bf16.msra.mxu0 %v585
          %662 = vmatmul.bf16.gmra.mxu0 %v442
          %v663 = vpop.f32.mrf.mxu0
          %v664 = vadd.f32 %v651, %v663
          %v665 = vpop.f32.mrf.mxu0
          %666 = vdwg.mxu0
          %667 = vmatpush.bf16.msra.mxu0 %v600
          %668 = vmatpush.bf16.msra.mxu0 %v599
          %669 = vmatpush.bf16.msra.mxu0 %v598
          %670 = vmatpush.bf16.msra.mxu0 %v597
          %671 = vmatpush.bf16.msra.mxu0 %v596
          %672 = vmatpush.bf16.msra.mxu0 %v595
          %673 = vmatpush.bf16.msra.mxu0 %v594
          %674 = vmatpush.bf16.msra.mxu0 %v593
          %675 = vmatmul.bf16.gmra.mxu0 %v443
          %v676 = vpop.f32.mrf.mxu0
          %v677 = vadd.f32 %v664, %v676
          %v678 = vpop.f32.mrf.mxu0
          %679 = vdwg.mxu0
          %680 = vmatpush.bf16.msra.mxu0 %v608
          %681 = vmatpush.bf16.msra.mxu0 %v607
          %682 = vmatpush.bf16.msra.mxu0 %v606
          %683 = vmatpush.bf16.msra.mxu0 %v605
          %684 = vmatpush.bf16.msra.mxu0 %v604
          %685 = vmatpush.bf16.msra.mxu0 %v603
          %686 = vmatpush.bf16.msra.mxu0 %v602
          %687 = vmatpush.bf16.msra.mxu0 %v601
          %688 = vmatmul.bf16.gmra.mxu0 %v444
          %v689 = vpop.f32.mrf.mxu0
          %v690 = vadd.f32 %v677, %v689
          %v691 = vpop.f32.mrf.mxu0
          %692 = vdwg.mxu0
          %v693 = vadd.f32 %v368, %v690
          %694 = vst [vmem:[#allocation2] sm:$0xff] %v693
        $region60: #{tpu_custom_call.1} parent=39 // pred_fallthru
          _
        %p695 = scmp.eq.s32.totalorder %s30, 1
        // Predicated region
        $region61: #{tpu_custom_call.1} parent=39 // pred_check
          %p696 = pneg %p695
        $region62: #{tpu_custom_call.1} parent=39 // pred_check_branch
          %698 = sbr.rel (%p696) target = $region64
        $region63: #{tpu_custom_call.1} parent=39 // pred_region
          %v699 = vld [vmem:[#allocation2] sm:$0xff]
          %v700 = vld [vmem:[%s2] sm:$0x1]
          %v702 = vperm.slane %v700, 0
          %v704 = vadd.f32 %v699, %v702
          %v705 = vpack.c.bf16 %v704, %v704
          %v706 = vld [vmem:[#allocation8] sm:$0xf]
          %v707 = vld [vmem:[#allocation8 + $0x4] sm:$0xf]
          %v708 = vld [vmem:[#allocation8 + $0x8] sm:$0xf]
          %v709 = vld [vmem:[#allocation8 + $0xc] sm:$0xf]
          %v710 = vld [vmem:[#allocation8 + $0x10] sm:$0xf]
          %v711 = vld [vmem:[#allocation8 + $0x14] sm:$0xf]
          %v712 = vld [vmem:[#allocation8 + $0x18] sm:$0xf]
          %v713 = vld [vmem:[#allocation8 + $0x1c] sm:$0xf]
          %v714 = vld [vmem:[#allocation8 + $0x20] sm:$0xf]
          %v715 = vld [vmem:[#allocation8 + $0x24] sm:$0xf]
          %v716 = vld [vmem:[#allocation8 + $0x28] sm:$0xf]
          %v717 = vld [vmem:[#allocation8 + $0x2c] sm:$0xf]
          %v718 = vld [vmem:[#allocation8 + $0x30] sm:$0xf]
          %v719 = vld [vmem:[#allocation8 + $0x34] sm:$0xf]
          %v720 = vld [vmem:[#allocation8 + $0x38] sm:$0xf]
          %v721 = vld [vmem:[#allocation8 + $0x3c] sm:$0xf]
          %v722 = vld [vmem:[%s357] sm:$0x1]
          %v724 = vperm.slane %v722, 0
          %v742 = vunpack.c.l.b16 %v706
          %v743 = vunpack.c.l.b16 %v707
          %v744 = vunpack.c.l.b16 %v708
          %v745 = vunpack.c.l.b16 %v709
          %v746 = vunpack.c.l.b16 %v710
          %v747 = vunpack.c.l.b16 %v711
          %v748 = vunpack.c.l.b16 %v712
          %v749 = vunpack.c.l.b16 %v713
          %v750 = vunpack.c.l.b16 %v714
          %v751 = vunpack.c.l.b16 %v715
          %v752 = vunpack.c.l.b16 %v716
          %v753 = vunpack.c.l.b16 %v717
          %v754 = vunpack.c.l.b16 %v718
          %v755 = vunpack.c.l.b16 %v719
          %v756 = vunpack.c.l.b16 %v720
          %v757 = vunpack.c.l.b16 %v721
          %v758 = vpack.c.b16 %v743, %v742
          %v759 = vpack.c.b16 %v745, %v744
          %v760 = vpack.c.b16 %v747, %v746
          %v761 = vpack.c.b16 %v749, %v748
          %v762 = vpack.c.b16 %v751, %v750
          %v763 = vpack.c.b16 %v753, %v752
          %v764 = vpack.c.b16 %v755, %v754
          %v765 = vpack.c.b16 %v757, %v756
          %774 = vmatpush.bf16.msra.mxu0 %v765
          %775 = vmatpush.bf16.msra.mxu0 %v764
          %776 = vmatpush.bf16.msra.mxu0 %v763
          %777 = vmatpush.bf16.msra.mxu0 %v762
          %778 = vmatpush.bf16.msra.mxu0 %v761
          %779 = vmatpush.bf16.msra.mxu0 %v760
          %780 = vmatpush.bf16.msra.mxu0 %v759
          %781 = vmatpush.bf16.msra.mxu0 %v758
          %782 = vmatmul.bf16.gmra.mxu0 %v705
          %v783 = vpop.f32.mrf.mxu0
          %v784 = vadd.f32 %v724, %v783
          %v785 = vpop.f32.mrf.mxu0
          %786 = vdwg.mxu0
          %787 = vst [vmem:[#allocation9] sm:$0xff] %v784
        $region64: #{tpu_custom_call.1} parent=39 // pred_fallthru
          _
        // Predicated region
        $region65: #{tpu_custom_call.1} parent=39 // pred_check
          %p788 = pneg %p197
        $region66: #{tpu_custom_call.1} parent=39 // pred_check_branch
          %790 = sbr.rel (%p788) target = $region68
        $region67: #{tpu_custom_call.1} parent=39 // pred_region
          %792 = vsyncadd [#allocation5], 0
          %s793 = sadd.s32 %s29, %s28
          %s794 = smul.addr %s793, 8
          %s795 = scalar_lea.hbm %s5, %s794
          %s797 = sshll.u32 [#allocation9], 4
          %s798 = int_to_ptr.vmem [resolvable:$true] %s797
          %s799 = sshll.u32 %s795, 4
          %s800 = int_to_ptr.hbm [resolvable:$true] %s799
          %802 = dma.vmem_to_hbm [thread:$0]  %s798, 128, %s800, [#allocation5]
        $region68: #{tpu_custom_call.1} parent=39 // pred_fallthru
          _
        // Predicated region
        $region69: #{tpu_custom_call.1} parent=39 // pred_check
          %p803 = pneg %p197
        $region70: #{tpu_custom_call.1} parent=39 // pred_check_branch
          %805 = sbr.rel (%p803) target = $region72
        $region71: #{tpu_custom_call.1} parent=39 // pred_region
          %807 = dma.done [#allocation5], 128
        $region72: #{tpu_custom_call.1} parent=39 // pred_fallthru
          _
      $region40: #{tpu_custom_call.1} parent=5 // pred_fallthru
        _
      %p808 = scmp.le.s32.totalorder 2, %s18
      // Predicated region
      $region73: #{tpu_custom_call.1} parent=5 // pred_check
        %p809 = pneg %p808
      $region74: #{tpu_custom_call.1} parent=5 // pred_check_branch
        %811 = sbr.rel (%p809) target = $region76
      $region75: #{tpu_custom_call.1} parent=5 // pred_region
        %s812 = ssub.s32 %s18, 2
      $region76: #{tpu_custom_call.1} parent=5 // pred_fallthru
        _
    $region6: #{tpu_custom_call.1} parent=1 // loop_footer
      %s22 = sadd.s32 1, %s18
    $region7: #{tpu_custom_call.1} parent=1 // loop_footer_branch
      %17 = sbr.rel target = $region3
    $region8: #{tpu_custom_call.1} parent=1 // loop_exit
      _
    %813 = vsyncpa [#allocation4], 1
    %s814 = scalar_lea.sflag [#allocation4], 1
    %815 = vsyncpa %s814, 1
    %816 = vsyncpa [#allocation7], 1
    %s817 = scalar_lea.sflag [#allocation7], 1
    %818 = vsyncpa %s817, 1
    %819 = vsyncpa [#allocation5], 1
    %s820 = scalar_lea.sflag [#allocation5], 1
    %821 = vsyncpa %s820, 1

</llo_original>
